<compile_context>
chip_gen: v7x
topology: tpu7x:2x2x1
jax: 0.10.0
libtpu: 0.0.40
codegen_flags: <defaults>
</compile_context>

<pallas_src>
import functools

import jax
import jax.numpy as jnp
from jax.experimental import pallas as pl
from jax.experimental.pallas import tpu as pltpu

_LANE = 128


def _round_up(x, m):
    return pl.cdiv(x, m) * m


def _row_align(*dtypes):
    """Packed sublane tile: 8 rows for 32-bit, 16 for 16-bit, 32 for 8-bit."""
    return max(8 * (4 // jnp.dtype(d).itemsize) for d in dtypes)


def _vmem_cap_bytes():
    """~75% of physical VMEM (v5e/v6e: 128 MiB -> 96; v7x: 64 MiB -> 48)."""
    try:
        cap = int(pltpu.get_tpu_info().vmem_capacity_bytes)
    except Exception:
        cap = 64 << 20      # conservative fallback, safe on every generation
    return (cap * 3) // 4


def _default_block_batch():
    # ~0.35 us fixed cost per grid step -> use big batch tiles.  v7x has only
    # 64 MiB VMEM (and 2 TCs sharing the batch), so use a smaller default.
    return 4096 if _vmem_cap_bytes() > (48 << 20) else 2048


def _vmem_limit_bytes(tb, s, hidden, a_pad, w_itemsize, x_itemsize, o_itemsize):
    weights = (s * hidden + hidden * hidden + hidden * a_pad) * w_itemsize
    biases = (2 * hidden + a_pad) * 4
    resident = 2 * (weights + biases)                     # pipeliner double-buffers
    io = 2 * tb * (s * x_itemsize + a_pad * o_itemsize)   # double-buffered in/out tiles
    act = tb * (3 * hidden + 2 * a_pad) * 4               # f32 activation temporaries
    need = int((resident + io + act) * 1.25) + (4 << 20)  # slack for compiler temps
    return max(min(need, _vmem_cap_bytes()), 32 << 20)


def _actor_kernel(max_action, x_ref, w1_ref, w2_ref, w3_ref, b_ref, out_ref):
    """One batch tile: 3 MXU matmuls (f32 accum) + f32 bias/ReLU/tanh epilogue."""
    cdt = w1_ref.dtype                    # matmul operand dtype (bf16 or f32)
    h_dim = w1_ref.shape[1]               # hidden width (static)

    x = x_ref[...].astype(cdt)            # in-kernel cast: no wrapper HBM copy

    # Layer 1: [TB, S] @ [S, H] -> +b1 -> ReLU
    h = jnp.dot(x, w1_ref[...], preferred_element_type=jnp.float32)
    h = jnp.maximum(h + b_ref[:, :h_dim], 0.0)

    # Layer 2: [TB, H] @ [H, H] -> +b2 -> ReLU
    h = jnp.dot(h.astype(cdt), w2_ref[...], preferred_element_type=jnp.float32)
    h = jnp.maximum(h + b_ref[:, h_dim:2 * h_dim], 0.0)

    # Layer 3: [TB, H] @ [H, A_pad] -> +b3 -> max_action * tanh (lane-dense store)
    h = jnp.dot(h.astype(cdt), w3_ref[...], preferred_element_type=jnp.float32)
    h = h + b_ref[:, 2 * h_dim:]
    out_ref[...] = (max_action * jnp.tanh(h)).astype(out_ref.dtype)


def prepare_actor_params(params, compute_dtype=jnp.bfloat16):
    """One-time conversion of torch-layout params into kernel layout.

    torch Linear stores W as (out, in); the kernel wants (in, out).  The last
    layer is zero-padded to a multiple of 128 output columns (lane-dense
    store) and the three biases are packed into a single f32 row.
    """
    w3_t = params["w3"].T
    hidden, action_dim = w3_t.shape
    a_pad = max(_LANE, _round_up(action_dim, _LANE))
    b3_pad = jnp.pad(params["b3"], (0, a_pad - action_dim))
    b_all = jnp.concatenate(
        [params["b1"], params["b2"], b3_pad]).astype(jnp.float32)[None, :]
    return {
        "w1": params["w1"].T.astype(compute_dtype),
        "w2": params["w2"].T.astype(compute_dtype),
        "w3": jnp.pad(w3_t, ((0, 0), (0, a_pad - action_dim))).astype(compute_dtype),
        "b_all": b_all,                    # (1, 2*hidden + a_pad) f32
        "action_dim": action_dim,
    }


def actor_forward(state, kparams, max_action, *, block_batch=None,
                  out_dtype=jnp.float32):
    """state: [B, state_dim].  kparams: output of prepare_actor_params."""
    B, S = state.shape
    w1, w2, w3, b_all = kparams["w1"], kparams["w2"], kparams["w3"], kparams["b_all"]
    action_dim = kparams["action_dim"]
    hidden = w1.shape[1]
    a_pad = w3.shape[1]

    if block_batch is None:
        block_batch = _default_block_batch()

    # Batch tiling: no wrapper-side padding — ragged / oversized last block is
    # handled by the pipeliner (OOB rows are garbage and sliced off below).
    align = _row_align(state.dtype, out_dtype)
    tb = _round_up(min(block_batch, B), align)
    if B > 256:
        # Guarantee >= 2 grid steps so v7x's two TensorCores both get work
        # (also improves DMA/compute overlap on single-TC chips, ~free).
        tb = min(tb, _round_up(pl.cdiv(B, 2), align))
    grid_b = pl.cdiv(B, tb)
    rows_out = grid_b * tb                 # output blocks always exact-fit

    kernel = functools.partial(_actor_kernel, float(max_action))
    resident = lambda i: (0, 0)            # weights/biases: same block every step

    vmem_limit = _vmem_limit_bytes(
        tb, S, hidden, a_pad,
        w1.dtype.itemsize, state.dtype.itemsize, jnp.dtype(out_dtype).itemsize)

    out = pl.pallas_call(
        kernel,
        out_shape=jax.ShapeDtypeStruct((rows_out, a_pad), out_dtype),
        grid=(grid_b,),
        in_specs=[
            pl.BlockSpec((tb, S), lambda i: (i, 0)),            # state tile
            pl.BlockSpec((S, hidden), resident),                # w1
            pl.BlockSpec((hidden, hidden), resident),           # w2
            pl.BlockSpec((hidden, a_pad), resident),            # w3 (lane padded)
            pl.BlockSpec((1, 2 * hidden + a_pad), resident),    # packed biases
        ],
        out_specs=pl.BlockSpec((tb, a_pad), lambda i: (i, 0)),
        compiler_params=pltpu.CompilerParams(
            dimension_semantics=("parallel",),
            vmem_limit_bytes=vmem_limit,
        ),
    )(state, w1, w2, w3, b_all)

    return out[:B, :action_dim]


def init_actor_params(key, state_dim, action_dim, hidden=256):
    """Deterministic init mirroring torch.nn.Linear default (U[-1/sqrt(in), 1/sqrt(in)])."""
    ks = jax.random.split(key, 6)

    def lin(kw, kb, fan_in, fan_out):
        bound = 1.0 / jnp.sqrt(jnp.float32(fan_in))
        w = jax.random.uniform(kw, (fan_out, fan_in), jnp.float32, -bound, bound)
        b = jax.random.uniform(kb, (fan_out,), jnp.float32, -bound, bound)
        return w, b

    w1, b1 = lin(ks[0], ks[1], state_dim, hidden)
    w2, b2 = lin(ks[2], ks[3], hidden, hidden)
    w3, b3 = lin(ks[4], ks[5], hidden, action_dim)
    return {"w1": w1, "b1": b1, "w2": w2, "b2": b2, "w3": w3, "b3": b3}


def actor_reference(state, params, max_action):
    """Pure-JAX reference (torch layout) for correctness check."""
    a = jnp.maximum(state @ params["w1"].T + params["b1"], 0.0)
    a = jnp.maximum(a @ params["w2"].T + params["b2"], 0.0)
    return max_action * jnp.tanh(a @ params["w3"].T + params["b3"])


if __name__ == "__main__":
    key = jax.random.PRNGKey(0)
    k_params, k_state, k_state2 = jax.random.split(key, 3)

    batch, state_dim, action_dim = 8, 16, 8
    max_action = 1.0

    params = init_actor_params(k_params, state_dim, action_dim)
    state = jax.random.normal(k_state, (batch, state_dim), jnp.float32)
    ref = actor_reference(state, params, max_action)

    # --- default path: bf16 weights, f32 accumulation + f32 epilogue --------
    kparams = prepare_actor_params(params)                  # bf16 by default
    out = jax.block_until_ready(actor_forward(state, kparams, max_action))
    assert out.shape == (batch, action_dim)
    assert jnp.allclose(out, ref, atol=5e-2, rtol=5e-2), "bf16 mismatch vs reference"

    # --- f32 weight path: tight-tolerance check ------------------------------
    kparams_f32 = prepare_actor_params(params, compute_dtype=jnp.float32)
    out_f32 = jax.block_until_ready(actor_forward(state, kparams_f32, max_action))
    assert jnp.allclose(out_f32, ref, atol=1e-5, rtol=1e-5), "f32 mismatch vs reference"

    # --- multi-block grid with a ragged last block (no wrapper-side pad) ----
    batch2 = 20
    state2 = jax.random.normal(k_state2, (batch2, state_dim), jnp.float32)
    ref2 = actor_reference(state2, params, max_action)
    out2 = jax.block_until_ready(
        actor_forward(state2, kparams_f32, max_action, block_batch=8))
    assert out2.shape == (batch2, action_dim)
    assert jnp.allclose(out2, ref2, atol=1e-5, rtol=1e-5), "ragged-grid f32 mismatch"

    # --- bf16 state input + bf16 output slab (halved padded writeback) ------
    out_bf16io = jax.block_until_ready(
        actor_forward(state.astype(jnp.bfloat16), kparams, max_action,
                      out_dtype=jnp.bfloat16))
    assert out_bf16io.shape == (batch, action_dim)
    assert jnp.allclose(out_bf16io.astype(jnp.float32), ref, atol=5e-2, rtol=5e-2), \
        "bf16-io mismatch vs reference"

    print("KERNEL_OK")
</pallas_src>

<mosaic_0001>
module attributes {stable_mosaic.version = 11 : i64} {
  func.func @_actor_kernel(%arg0: i32, %arg1: memref<8x16xf32, #tpu.memory_space<vmem>>, %arg2: memref<16x256xbf16, #tpu.memory_space<vmem>>, %arg3: memref<256x256xbf16, #tpu.memory_space<vmem>>, %arg4: memref<256x128xbf16, #tpu.memory_space<vmem>>, %arg5: memref<1x640xf32, #tpu.memory_space<vmem>>, %arg6: memref<8x128xf32, #tpu.memory_space<vmem>>) attributes {dimension_semantics = [#tpu.dimension_semantics<parallel>], iteration_bounds = array<i64: 1>, scalar_prefetch = 0 : i64, scratch_operands = 0 : i64, tpu.core_type = #tpu.core_type<tc>, window_params = [{transform_indices = @transform_0, window_bounds = array<i64: 8, 16>}, {pipeline_mode = #tpu.pipeline_mode<synchronous>, transform_indices = @transform_1, window_bounds = array<i64: 16, 256>}, {pipeline_mode = #tpu.pipeline_mode<synchronous>, transform_indices = @transform_2, window_bounds = array<i64: 256, 256>}, {pipeline_mode = #tpu.pipeline_mode<synchronous>, transform_indices = @transform_3, window_bounds = array<i64: 256, 128>}, {pipeline_mode = #tpu.pipeline_mode<synchronous>, transform_indices = @transform_4, window_bounds = array<i64: 1, 640>}, {transform_indices = @transform_5, window_bounds = array<i64: 8, 128>}]} {
    %c0 = arith.constant 0 : index
    %c0_0 = arith.constant 0 : index
    %0 = vector.load %arg1[%c0, %c0_0] : memref<8x16xf32, #tpu.memory_space<vmem>>, vector<8x16xf32>
    %1 = arith.truncf %0 : vector<8x16xf32> to vector<8x16xbf16>
    %c0_1 = arith.constant 0 : index
    %c0_2 = arith.constant 0 : index
    %2 = vector.load %arg2[%c0_1, %c0_2] : memref<16x256xbf16, #tpu.memory_space<vmem>>, vector<16x256xbf16>
    %cst = arith.constant dense<0.000000e+00> : vector<8x256xf32>
    %3 = tpu.matmul %1, %2, %cst {dimension_numbers = #tpu.dot_dimension_numbers<[1], [0], [0], [1], [0, 0, 1, 1], [], []>} : vector<8x16xbf16>, vector<16x256xbf16>, vector<8x256xf32> -> vector<8x256xf32>
    %c0_3 = arith.constant 0 : index
    %c0_4 = arith.constant 0 : index
    %4 = vector.load %arg5[%c0_3, %c0_4] : memref<1x640xf32, #tpu.memory_space<vmem>>, vector<1x256xf32>
    %5 = vector.broadcast %4 : vector<1x256xf32> to vector<8x256xf32>
    %6 = arith.addf %3, %5 : vector<8x256xf32>
    %cst_5 = arith.constant 0.000000e+00 : f32
    %7 = vector.broadcast %cst_5 : f32 to vector<8x256xf32>
    %8 = arith.maximumf %6, %7 : vector<8x256xf32>
    %9 = arith.truncf %8 : vector<8x256xf32> to vector<8x256xbf16>
    %c0_6 = arith.constant 0 : index
    %c0_7 = arith.constant 0 : index
    %10 = vector.load %arg3[%c0_6, %c0_7] : memref<256x256xbf16, #tpu.memory_space<vmem>>, vector<256x256xbf16>
    %cst_8 = arith.constant dense<0.000000e+00> : vector<8x256xf32>
    %11 = tpu.matmul %9, %10, %cst_8 {dimension_numbers = #tpu.dot_dimension_numbers<[1], [0], [0], [1], [0, 0, 1, 1], [], []>} : vector<8x256xbf16>, vector<256x256xbf16>, vector<8x256xf32> -> vector<8x256xf32>
    %c0_9 = arith.constant 0 : index
    %c256 = arith.constant 256 : index
    %12 = vector.load %arg5[%c0_9, %c256] : memref<1x640xf32, #tpu.memory_space<vmem>>, vector<1x256xf32>
    %13 = vector.broadcast %12 : vector<1x256xf32> to vector<8x256xf32>
    %14 = arith.addf %11, %13 : vector<8x256xf32>
    %cst_10 = arith.constant 0.000000e+00 : f32
    %15 = vector.broadcast %cst_10 : f32 to vector<8x256xf32>
    %16 = arith.maximumf %14, %15 : vector<8x256xf32>
    %17 = arith.truncf %16 : vector<8x256xf32> to vector<8x256xbf16>
    %c0_11 = arith.constant 0 : index
    %c0_12 = arith.constant 0 : index
    %18 = vector.load %arg4[%c0_11, %c0_12] : memref<256x128xbf16, #tpu.memory_space<vmem>>, vector<256x128xbf16>
    %cst_13 = arith.constant dense<0.000000e+00> : vector<8x128xf32>
    %19 = tpu.matmul %17, %18, %cst_13 {dimension_numbers = #tpu.dot_dimension_numbers<[1], [0], [0], [1], [0, 0, 1, 1], [], []>} : vector<8x256xbf16>, vector<256x128xbf16>, vector<8x128xf32> -> vector<8x128xf32>
    %c0_14 = arith.constant 0 : index
    %c512 = arith.constant 512 : index
    %20 = vector.load %arg5[%c0_14, %c512] : memref<1x640xf32, #tpu.memory_space<vmem>>, vector<1x128xf32>
    %21 = vector.broadcast %20 : vector<1x128xf32> to vector<8x128xf32>
    %22 = arith.addf %19, %21 : vector<8x128xf32>
    %23 = math.tanh %22 : vector<8x128xf32>
    %cst_15 = arith.constant 1.000000e+00 : f32
    %24 = vector.broadcast %cst_15 : f32 to vector<8x128xf32>
    %25 = arith.mulf %24, %23 : vector<8x128xf32>
    %c0_16 = arith.constant 0 : index
    %c0_17 = arith.constant 0 : index
    %26 = vector.load %arg6[%c0_16, %c0_17] : memref<8x128xf32, #tpu.memory_space<vmem>>, vector<8x128xf32>
    tpu.vector_store %arg6[%c0_16, %c0_17], %25 {strides = array<i32>} : memref<8x128xf32, #tpu.memory_space<vmem>>, vector<8x128xf32>,
    return
  }
  func.func @transform_0(%arg0: i32) -> (i32, i32) {
    %c0_i32 = arith.constant 0 : i32
    %c0_i32_0 = arith.constant 0 : i32
    return %arg0, %c0_i32 : i32, i32
  }
  func.func @transform_1(%arg0: i32) -> (i32, i32) {
    %c0_i32 = arith.constant 0 : i32
    %c0_i32_0 = arith.constant 0 : i32
    %c0_i32_1 = arith.constant 0 : i32
    return %c0_i32, %c0_i32_0 : i32, i32
  }
  func.func @transform_2(%arg0: i32) -> (i32, i32) {
    %c0_i32 = arith.constant 0 : i32
    %c0_i32_0 = arith.constant 0 : i32
    %c0_i32_1 = arith.constant 0 : i32
    return %c0_i32, %c0_i32_0 : i32, i32
  }
  func.func @transform_3(%arg0: i32) -> (i32, i32) {
    %c0_i32 = arith.constant 0 : i32
    %c0_i32_0 = arith.constant 0 : i32
    %c0_i32_1 = arith.constant 0 : i32
    return %c0_i32, %c0_i32_0 : i32, i32
  }
  func.func @transform_4(%arg0: i32) -> (i32, i32) {
    %c0_i32 = arith.constant 0 : i32
    %c0_i32_0 = arith.constant 0 : i32
    %c0_i32_1 = arith.constant 0 : i32
    return %c0_i32, %c0_i32_0 : i32, i32
  }
  func.func @transform_5(%arg0: i32) -> (i32, i32) {
    %c0_i32 = arith.constant 0 : i32
    %c0_i32_0 = arith.constant 0 : i32
    return %arg0, %c0_i32 : i32, i32
  }
}

</mosaic_0001>

<llo_original>
// kernel: tpu_custom_call.1
$region0: #{tpu_custom_call.1}
  #allocation0 [shape = 'u32[]', space=smem, size = 0x4, offset = 0x4, fixed_abs, tag = 'smem constant byte address 0x4 - core index']
  #allocation1 [shape = 'u32[144,128]{1,0:T(1,128)}', space=vmem, size = 0x12000, scoped, tag = 'internal scratch']
  %s0 = inlined_call_operand.hbm [shape: f32[8,16], index: 0, kind: input, shape index: {}]
  %s1 = inlined_call_operand.hbm [shape: bf16[16,256], index: 1, kind: input, shape index: {}]
  %s2 = inlined_call_operand.hbm [shape: bf16[256,256], index: 2, kind: input, shape index: {}]
  %s3 = inlined_call_operand.hbm [shape: bf16[256,128], index: 3, kind: input, shape index: {}]
  %s4 = inlined_call_operand.vmem [shape: f32[1,640], index: 4, kind: input, shape index: {}]
  %s5 = inlined_call_operand.hbm [shape: f32[8,128], index: 5, kind: output, shape index: {}]
  %s6 = sld [smem:[#allocation0]]
  $region46: #{tpu_custom_call.1} parent=0
    _
  %s8 = ssub.s32 1, %s6
  %s9 = scalar_select 0, %s8, %s6
  $region1: #{tpu_custom_call.1} parent=0
    #allocation2 [shape = 'u8[4096]{0}', space=vmem, size = 0x1000, scoped, tag = 'input window, operand 0, single buffered']
    #allocation3 [shape = 's32[1]{0}', space=sflag, size = 0x4, scoped, tag = 'scoped memory for tpu_custom_call.1']
    #allocation4 [shape = 's32[1]{0}', space=sflag, size = 0x4, scoped, tag = 'scoped memory for tpu_custom_call.1']
    #allocation5 [shape = 'u8[8192]{0}', space=vmem, size = 0x2000, scoped, tag = 'input window, operand 1, single buffered']
    #allocation6 [shape = 's32[1]{0}', space=sflag, size = 0x4, scoped, tag = 'scoped memory for tpu_custom_call.1']
    #allocation7 [shape = 'u8[131072]{0}', space=vmem, size = 0x20000, scoped, tag = 'input window, operand 2, single buffered']
    #allocation8 [shape = 'u8[65536]{0}', space=vmem, size = 0x10000, scoped, tag = 'input window, operand 3, single buffered']
    #allocation9 [shape = 's32[1]{0}', space=sflag, size = 0x4, scoped, tag = 'scoped memory for tpu_custom_call.1']
    #allocation10 [shape = 'u8[4096]{0}', space=vmem, size = 0x1000, scoped, tag = 'output window, operand 0, single buffered']
    %10 = vsyncpa [#allocation3], 0
    %11 = vsyncpa [#allocation6], 0
    %12 = vsyncpa [#allocation9], 0
    %13 = vsyncpa [#allocation4], 0
    // Predicated region
    $region2: #{tpu_custom_call.1} parent=1 // pred_check
      _
    $region3: #{tpu_custom_call.1} parent=1 // pred_check_branch
      %15 = sbr.rel (0) target = $region5
    $region4: #{tpu_custom_call.1} parent=1 // pred_region
      %s17 = ssub.s32 128, 128
      %18 = vsyncadd [#allocation3], %s17
      %s20 = sshll.u32 [#allocation2], 4
      %s21 = int_to_ptr.vmem [resolvable:$true] %s20
      %23 = dma.hbm_to_vmem [thread:$0]  %s0, 128, %s21, [#allocation3]
    $region5: #{tpu_custom_call.1} parent=1 // pred_fallthru
      _
    // Predicated region
    $region6: #{tpu_custom_call.1} parent=1 // pred_check
      _
    $region7: #{tpu_custom_call.1} parent=1 // pred_check_branch
      %25 = sbr.rel (0) target = $region9
    $region8: #{tpu_custom_call.1} parent=1 // pred_region
      %s27 = ssub.s32 256, 256
      %28 = vsyncadd [#allocation6], %s27
      %s29 = sshll.u32 [#allocation5], 4
      %s30 = int_to_ptr.vmem [resolvable:$true] %s29
      %35 = dma.hbm_to_vmem [thread:$0]  %s1, 256, %s30, [#allocation6], 128, 128, 8
    $region9: #{tpu_custom_call.1} parent=1 // pred_fallthru
      _
    // Predicated region
    $region10: #{tpu_custom_call.1} parent=1 // pred_check
      _
    $region11: #{tpu_custom_call.1} parent=1 // pred_check_branch
      %37 = sbr.rel (0) target = $region13
    $region12: #{tpu_custom_call.1} parent=1 // pred_region
      %s39 = ssub.s32 4096, 4096
      %40 = vsyncadd [#allocation6], %s39
      %s41 = sshll.u32 [#allocation7], 4
      %s42 = int_to_ptr.vmem [resolvable:$true] %s41
      %47 = dma.hbm_to_vmem [thread:$0]  %s2, 4096, %s42, [#allocation6], 128, 128, 8
    $region13: #{tpu_custom_call.1} parent=1 // pred_fallthru
      _
    // Predicated region
    $region14: #{tpu_custom_call.1} parent=1 // pred_check
      _
    $region15: #{tpu_custom_call.1} parent=1 // pred_check_branch
      %49 = sbr.rel (0) target = $region17
    $region16: #{tpu_custom_call.1} parent=1 // pred_region
      %s51 = ssub.s32 2048, 2048
      %52 = vsyncadd [#allocation9], %s51
      %s53 = sshll.u32 [#allocation8], 4
      %s54 = int_to_ptr.vmem [resolvable:$true] %s53
      %59 = dma.hbm_to_vmem [thread:$0]  %s3, 2048, %s54, [#allocation9], 64, 64, 4
    $region17: #{tpu_custom_call.1} parent=1 // pred_fallthru
      _
    // Predicated region
    $region18: #{tpu_custom_call.1} parent=1 // pred_check
      _
    $region19: #{tpu_custom_call.1} parent=1 // pred_check_branch
      %61 = sbr.rel (0) target = $region21
    $region20: #{tpu_custom_call.1} parent=1 // pred_region
      _
    $region21: #{tpu_custom_call.1} parent=1 // pred_fallthru
      _
    // Predicated region
    $region22: #{tpu_custom_call.1} parent=1 // pred_check
      _
    $region23: #{tpu_custom_call.1} parent=1 // pred_check_branch
      %63 = sbr.rel (0) target = $region25
    $region24: #{tpu_custom_call.1} parent=1 // pred_region
      %64 = dma.done [#allocation3], 128
    $region25: #{tpu_custom_call.1} parent=1 // pred_fallthru
      _
    // Predicated region
    $region26: #{tpu_custom_call.1} parent=1 // pred_check
      _
    $region27: #{tpu_custom_call.1} parent=1 // pred_check_branch
      %66 = sbr.rel (0) target = $region29
    $region28: #{tpu_custom_call.1} parent=1 // pred_region
      %67 = dma.done [#allocation6], 256
    $region29: #{tpu_custom_call.1} parent=1 // pred_fallthru
      _
    // Predicated region
    $region30: #{tpu_custom_call.1} parent=1 // pred_check
      _
    $region31: #{tpu_custom_call.1} parent=1 // pred_check_branch
      %69 = sbr.rel (0) target = $region33
    $region32: #{tpu_custom_call.1} parent=1 // pred_region
      %70 = dma.done [#allocation6], 4096
    $region33: #{tpu_custom_call.1} parent=1 // pred_fallthru
      _
    // Predicated region
    $region34: #{tpu_custom_call.1} parent=1 // pred_check
      _
    $region35: #{tpu_custom_call.1} parent=1 // pred_check_branch
      %72 = sbr.rel (0) target = $region37
    $region36: #{tpu_custom_call.1} parent=1 // pred_region
      %73 = dma.done [#allocation9], 2048
    $region37: #{tpu_custom_call.1} parent=1 // pred_fallthru
      _
    %v75 = vld [vmem:[#allocation2] sm:$0xff]
    %v76 = vpack.c.bf16 %v75, %v75
    %v77 = vld [vmem:[#allocation5] sm:$0xff]
    %v78 = vld [vmem:[#allocation5 + $0x8] sm:$0xff]
    %v79 = vld [vmem:[%s4] sm:$0x3]
    %v81 = vlaneseq
    %v82 = vshrl.u32 %v81, 7
    %v83 = vsub.s32 0, %v82
    %v84 = vrot.slane %v79, %v83
    %v85 = vlaneseq
    %v86 = vshrl.u32 %v85, 7
    %v87 = vsub.s32 1, %v86
    %v88 = vrot.slane %v79, %v87
    %v93 = vunpack.c.l.b16 %v77
    %v94 = vunpack.c.h.b16 %v77
    %v95 = vunpack.c.l.b16 %v78
    %v96 = vunpack.c.h.b16 %v78
    %v97 = vpack.c.b16 %v95, %v93
    %v98 = vpack.c.b16 %v96, %v94
    %vm101 = vcmask 130048
    %v103 = vsel %vm101, %v76, 0
    %105 = vmatprep.subr.bf16.mxu0 %v98
    %106 = vmatpush1.bf16.msra.mxu0 %v97
    %107 = vmatprep.subr.bf16.mxu0 0
    %108 = vmatpush1.bf16.msra.mxu0 0
    %109 = vmatprep.subr.bf16.mxu0 0
    %110 = vmatpush1.bf16.msra.mxu0 0
    %111 = vmatprep.subr.bf16.mxu0 0
    %112 = vmatpush1.bf16.msra.mxu0 0
    %113 = vmatprep.subr.bf16.mxu0 0
    %114 = vmatpush1.bf16.msra.mxu0 0
    %115 = vmatprep.subr.bf16.mxu0 0
    %116 = vmatpush1.bf16.msra.mxu0 0
    %117 = vmatprep.subr.bf16.mxu0 0
    %118 = vmatpush1.bf16.msra.mxu0 0
    %119 = vmatprep.subr.bf16.mxu0 0
    %120 = vmatpush1.bf16.msra.mxu0 0
    %121 = vmatprep.subr.bf16.mxu0 0
    %122 = vmatpush1.bf16.msra.mxu0 0
    %123 = vmatprep.subr.bf16.mxu0 0
    %124 = vmatpush1.bf16.msra.mxu0 0
    %125 = vmatprep.subr.bf16.mxu0 0
    %126 = vmatpush1.bf16.msra.mxu0 0
    %127 = vmatprep.subr.bf16.mxu0 0
    %128 = vmatpush1.bf16.msra.mxu0 0
    %129 = vmatprep.subr.bf16.mxu0 0
    %130 = vmatpush1.bf16.msra.mxu0 0
    %131 = vmatprep.subr.bf16.mxu0 0
    %132 = vmatpush1.bf16.msra.mxu0 0
    %133 = vmatprep.subr.bf16.mxu0 0
    %134 = vmatpush1.bf16.msra.mxu0 0
    %135 = vmatprep.subr.bf16.mxu0 0
    %136 = vmatpush1.bf16.msra.mxu0 0
    %137 = vmatprep.mubr.bf16.mxu0 0
    %138 = vmatmul.mubr.bf16.gmra.mrb[0].mxu0 %v103
    %v139 = vpop.f32.mrb[0].mxu0
    %v140 = vadd.f32 %v84, %v139
    %v141 = vpop.f32.mrb[0].mxu0
    %v142 = vadd.f32 %v88, %v141
    %v143 = vpop.f32.mrb[0].mxu0
    %v144 = vpop.f32.mrb[0].mxu0
    %145 = vdwg.mxu0
    %v146 = vmax.f32 %v140, 0.0
    %v147 = vmax.f32 %v142, 0.0
    %v148 = vpack.c.bf16 %v146, %v146
    %v149 = vpack.c.bf16 %v147, %v147
    %v150 = vld [vmem:[#allocation7] sm:$0xff]
    %v151 = vld [vmem:[#allocation7 + $0x8] sm:$0xff]
    %v152 = vld [vmem:[#allocation7 + $0x10] sm:$0xff]
    %v153 = vld [vmem:[#allocation7 + $0x18] sm:$0xff]
    %v154 = vld [vmem:[#allocation7 + $0x20] sm:$0xff]
    %v155 = vld [vmem:[#allocation7 + $0x28] sm:$0xff]
    %v156 = vld [vmem:[#allocation7 + $0x30] sm:$0xff]
    %v157 = vld [vmem:[#allocation7 + $0x38] sm:$0xff]
    %v158 = vld [vmem:[#allocation7 + $0x40] sm:$0xff]
    %v159 = vld [vmem:[#allocation7 + $0x48] sm:$0xff]
    %v160 = vld [vmem:[#allocation7 + $0x50] sm:$0xff]
    %v161 = vld [vmem:[#allocation7 + $0x58] sm:$0xff]
    %v162 = vld [vmem:[#allocation7 + $0x60] sm:$0xff]
    %v163 = vld [vmem:[#allocation7 + $0x68] sm:$0xff]
    %v164 = vld [vmem:[#allocation7 + $0x70] sm:$0xff]
    %v165 = vld [vmem:[#allocation7 + $0x78] sm:$0xff]
    %v166 = vld [vmem:[#allocation7 + $0x80] sm:$0xff]
    %v167 = vld [vmem:[#allocation7 + $0x88] sm:$0xff]
    %v168 = vld [vmem:[#allocation7 + $0x90] sm:$0xff]
    %v169 = vld [vmem:[#allocation7 + $0x98] sm:$0xff]
    %v170 = vld [vmem:[#allocation7 + $0xa0] sm:$0xff]
    %v171 = vld [vmem:[#allocation7 + $0xa8] sm:$0xff]
    %v172 = vld [vmem:[#allocation7 + $0xb0] sm:$0xff]
    %v173 = vld [vmem:[#allocation7 + $0xb8] sm:$0xff]
    %v174 = vld [vmem:[#allocation7 + $0xc0] sm:$0xff]
    %v175 = vld [vmem:[#allocation7 + $0xc8] sm:$0xff]
    %v176 = vld [vmem:[#allocation7 + $0xd0] sm:$0xff]
    %v177 = vld [vmem:[#allocation7 + $0xd8] sm:$0xff]
    %v178 = vld [vmem:[#allocation7 + $0xe0] sm:$0xff]
    %v179 = vld [vmem:[#allocation7 + $0xe8] sm:$0xff]
    %v180 = vld [vmem:[#allocation7 + $0xf0] sm:$0xff]
    %v181 = vld [vmem:[#allocation7 + $0xf8] sm:$0xff]
    %v182 = vld [vmem:[%s4 + $0x2] sm:$0x3]
    %v184 = vlaneseq
    %v185 = vshrl.u32 %v184, 7
    %v186 = vsub.s32 0, %v185
    %v187 = vrot.slane %v182, %v186
    %v188 = vlaneseq
    %v189 = vshrl.u32 %v188, 7
    %v190 = vsub.s32 1, %v189
    %v191 = vrot.slane %v182, %v190
    %v226 = vunpack.c.l.b16 %v150
    %v227 = vunpack.c.h.b16 %v150
    %v228 = vunpack.c.l.b16 %v151
    %v229 = vunpack.c.h.b16 %v151
    %v230 = vunpack.c.l.b16 %v152
    %v231 = vunpack.c.h.b16 %v152
    %v232 = vunpack.c.l.b16 %v153
    %v233 = vunpack.c.h.b16 %v153
    %v234 = vunpack.c.l.b16 %v154
    %v235 = vunpack.c.h.b16 %v154
    %v236 = vunpack.c.l.b16 %v155
    %v237 = vunpack.c.h.b16 %v155
    %v238 = vunpack.c.l.b16 %v156
    %v239 = vunpack.c.h.b16 %v156
    %v240 = vunpack.c.l.b16 %v157
    %v241 = vunpack.c.h.b16 %v157
    %v242 = vunpack.c.l.b16 %v158
    %v243 = vunpack.c.h.b16 %v158
    %v244 = vunpack.c.l.b16 %v159
    %v245 = vunpack.c.h.b16 %v159
    %v246 = vunpack.c.l.b16 %v160
    %v247 = vunpack.c.h.b16 %v160
    %v248 = vunpack.c.l.b16 %v161
    %v249 = vunpack.c.h.b16 %v161
    %v250 = vunpack.c.l.b16 %v162
    %v251 = vunpack.c.h.b16 %v162
    %v252 = vunpack.c.l.b16 %v163
    %v253 = vunpack.c.h.b16 %v163
    %v254 = vunpack.c.l.b16 %v164
    %v255 = vunpack.c.h.b16 %v164
    %v256 = vunpack.c.l.b16 %v165
    %v257 = vunpack.c.h.b16 %v165
    %v258 = vunpack.c.l.b16 %v166
    %v259 = vunpack.c.h.b16 %v166
    %v260 = vunpack.c.l.b16 %v167
    %v261 = vunpack.c.h.b16 %v167
    %v262 = vunpack.c.l.b16 %v168
    %v263 = vunpack.c.h.b16 %v168
    %v264 = vunpack.c.l.b16 %v169
    %v265 = vunpack.c.h.b16 %v169
    %v266 = vunpack.c.l.b16 %v170
    %v267 = vunpack.c.h.b16 %v170
    %v268 = vunpack.c.l.b16 %v171
    %v269 = vunpack.c.h.b16 %v171
    %v270 = vunpack.c.l.b16 %v172
    %v271 = vunpack.c.h.b16 %v172
    %v272 = vunpack.c.l.b16 %v173
    %v273 = vunpack.c.h.b16 %v173
    %v274 = vunpack.c.l.b16 %v174
    %v275 = vunpack.c.h.b16 %v174
    %v276 = vunpack.c.l.b16 %v175
    %v277 = vunpack.c.h.b16 %v175
    %v278 = vunpack.c.l.b16 %v176
    %v279 = vunpack.c.h.b16 %v176
    %v280 = vunpack.c.l.b16 %v177
    %v281 = vunpack.c.h.b16 %v177
    %v282 = vunpack.c.l.b16 %v178
    %v283 = vunpack.c.h.b16 %v178
    %v284 = vunpack.c.l.b16 %v179
    %v285 = vunpack.c.h.b16 %v179
    %v286 = vunpack.c.l.b16 %v180
    %v287 = vunpack.c.h.b16 %v180
    %v288 = vunpack.c.l.b16 %v181
    %v289 = vunpack.c.h.b16 %v181
    %v290 = vpack.c.b16 %v228, %v226
    %v291 = vpack.c.b16 %v229, %v227
    %v292 = vpack.c.b16 %v232, %v230
    %v293 = vpack.c.b16 %v233, %v231
    %v294 = vpack.c.b16 %v236, %v234
    %v295 = vpack.c.b16 %v237, %v235
    %v296 = vpack.c.b16 %v240, %v238
    %v297 = vpack.c.b16 %v241, %v239
    %v298 = vpack.c.b16 %v244, %v242
    %v299 = vpack.c.b16 %v245, %v243
    %v300 = vpack.c.b16 %v248, %v246
    %v301 = vpack.c.b16 %v249, %v247
    %v302 = vpack.c.b16 %v252, %v250
    %v303 = vpack.c.b16 %v253, %v251
    %v304 = vpack.c.b16 %v256, %v254
    %v305 = vpack.c.b16 %v257, %v255
    %v306 = vpack.c.b16 %v260, %v258
    %v307 = vpack.c.b16 %v261, %v259
    %v308 = vpack.c.b16 %v264, %v262
    %v309 = vpack.c.b16 %v265, %v263
    %v310 = vpack.c.b16 %v268, %v266
    %v311 = vpack.c.b16 %v269, %v267
    %v312 = vpack.c.b16 %v272, %v270
    %v313 = vpack.c.b16 %v273, %v271
    %v314 = vpack.c.b16 %v276, %v274
    %v315 = vpack.c.b16 %v277, %v275
    %v316 = vpack.c.b16 %v280, %v278
    %v317 = vpack.c.b16 %v281, %v279
    %v318 = vpack.c.b16 %v284, %v282
    %v319 = vpack.c.b16 %v285, %v283
    %v320 = vpack.c.b16 %v288, %v286
    %v321 = vpack.c.b16 %v289, %v287
    %354 = vmatprep.subr.bf16.mxu0 %v291
    %355 = vmatpush1.bf16.msra.mxu0 %v290
    %356 = vmatprep.subr.bf16.mxu0 %v293
    %357 = vmatpush1.bf16.msra.mxu0 %v292
    %358 = vmatprep.subr.bf16.mxu0 %v295
    %359 = vmatpush1.bf16.msra.mxu0 %v294
    %360 = vmatprep.subr.bf16.mxu0 %v297
    %361 = vmatpush1.bf16.msra.mxu0 %v296
    %362 = vmatprep.subr.bf16.mxu0 %v299
    %363 = vmatpush1.bf16.msra.mxu0 %v298
    %364 = vmatprep.subr.bf16.mxu0 %v301
    %365 = vmatpush1.bf16.msra.mxu0 %v300
    %366 = vmatprep.subr.bf16.mxu0 %v303
    %367 = vmatpush1.bf16.msra.mxu0 %v302
    %368 = vmatprep.subr.bf16.mxu0 %v305
    %369 = vmatpush1.bf16.msra.mxu0 %v304
    %370 = vmatprep.subr.bf16.mxu0 %v307
    %371 = vmatpush1.bf16.msra.mxu0 %v306
    %372 = vmatprep.subr.bf16.mxu0 %v309
    %373 = vmatpush1.bf16.msra.mxu0 %v308
    %374 = vmatprep.subr.bf16.mxu0 %v311
    %375 = vmatpush1.bf16.msra.mxu0 %v310
    %376 = vmatprep.subr.bf16.mxu0 %v313
    %377 = vmatpush1.bf16.msra.mxu0 %v312
    %378 = vmatprep.subr.bf16.mxu0 %v315
    %379 = vmatpush1.bf16.msra.mxu0 %v314
    %380 = vmatprep.subr.bf16.mxu0 %v317
    %381 = vmatpush1.bf16.msra.mxu0 %v316
    %382 = vmatprep.subr.bf16.mxu0 %v319
    %383 = vmatpush1.bf16.msra.mxu0 %v318
    %384 = vmatprep.subr.bf16.mxu0 %v321
    %385 = vmatpush1.bf16.msra.mxu0 %v320
    %386 = vmatprep.mubr.bf16.mxu0 %v149
    %387 = vmatmul.mubr.bf16.gmra.mrb[0].mxu0 %v148
    %v388 = vpop.f32.mrb[0].mxu0
    %v389 = vadd.f32 %v187, %v388
    %v390 = vpop.f32.mrb[0].mxu0
    %v391 = vadd.f32 %v191, %v390
    %v392 = vpop.f32.mrb[0].mxu0
    %v393 = vpop.f32.mrb[0].mxu0
    %394 = vdwg.mxu0
    %v395 = vmax.f32 %v389, 0.0
    %v396 = vmax.f32 %v391, 0.0
    %v397 = vpack.c.bf16 %v395, %v395
    %v398 = vpack.c.bf16 %v396, %v396
    %v399 = vld [vmem:[#allocation8] sm:$0xf]
    %v400 = vld [vmem:[#allocation8 + $0x4] sm:$0xf]
    %v401 = vld [vmem:[#allocation8 + $0x8] sm:$0xf]
    %v402 = vld [vmem:[#allocation8 + $0xc] sm:$0xf]
    %v403 = vld [vmem:[#allocation8 + $0x10] sm:$0xf]
    %v404 = vld [vmem:[#allocation8 + $0x14] sm:$0xf]
    %v405 = vld [vmem:[#allocation8 + $0x18] sm:$0xf]
    %v406 = vld [vmem:[#allocation8 + $0x1c] sm:$0xf]
    %v407 = vld [vmem:[#allocation8 + $0x20] sm:$0xf]
    %v408 = vld [vmem:[#allocation8 + $0x24] sm:$0xf]
    %v409 = vld [vmem:[#allocation8 + $0x28] sm:$0xf]
    %v410 = vld [vmem:[#allocation8 + $0x2c] sm:$0xf]
    %v411 = vld [vmem:[#allocation8 + $0x30] sm:$0xf]
    %v412 = vld [vmem:[#allocation8 + $0x34] sm:$0xf]
    %v413 = vld [vmem:[#allocation8 + $0x38] sm:$0xf]
    %v414 = vld [vmem:[#allocation8 + $0x3c] sm:$0xf]
    %v415 = vld [vmem:[#allocation8 + $0x40] sm:$0xf]
    %v416 = vld [vmem:[#allocation8 + $0x44] sm:$0xf]
    %v417 = vld [vmem:[#allocation8 + $0x48] sm:$0xf]
    %v418 = vld [vmem:[#allocation8 + $0x4c] sm:$0xf]
    %v419 = vld [vmem:[#allocation8 + $0x50] sm:$0xf]
    %v420 = vld [vmem:[#allocation8 + $0x54] sm:$0xf]
    %v421 = vld [vmem:[#allocation8 + $0x58] sm:$0xf]
    %v422 = vld [vmem:[#allocation8 + $0x5c] sm:$0xf]
    %v423 = vld [vmem:[#allocation8 + $0x60] sm:$0xf]
    %v424 = vld [vmem:[#allocation8 + $0x64] sm:$0xf]
    %v425 = vld [vmem:[#allocation8 + $0x68] sm:$0xf]
    %v426 = vld [vmem:[#allocation8 + $0x6c] sm:$0xf]
    %v427 = vld [vmem:[#allocation8 + $0x70] sm:$0xf]
    %v428 = vld [vmem:[#allocation8 + $0x74] sm:$0xf]
    %v429 = vld [vmem:[#allocation8 + $0x78] sm:$0xf]
    %v430 = vld [vmem:[#allocation8 + $0x7c] sm:$0xf]
    %v431 = vld [vmem:[%s4 + $0x4] sm:$0x1]
    %v433 = vlaneseq
    %v434 = vshrl.u32 %v433, 7
    %v435 = vsub.s32 0, %v434
    %v436 = vrot.slane %v431, %v435
    %v470 = vunpack.c.l.b16 %v399
    %v471 = vunpack.c.l.b16 %v400
    %v472 = vunpack.c.l.b16 %v401
    %v473 = vunpack.c.l.b16 %v402
    %v474 = vunpack.c.l.b16 %v403
    %v475 = vunpack.c.l.b16 %v404
    %v476 = vunpack.c.l.b16 %v405
    %v477 = vunpack.c.l.b16 %v406
    %v478 = vunpack.c.l.b16 %v407
    %v479 = vunpack.c.l.b16 %v408
    %v480 = vunpack.c.l.b16 %v409
    %v481 = vunpack.c.l.b16 %v410
    %v482 = vunpack.c.l.b16 %v411
    %v483 = vunpack.c.l.b16 %v412
    %v484 = vunpack.c.l.b16 %v413
    %v485 = vunpack.c.l.b16 %v414
    %v486 = vunpack.c.l.b16 %v415
    %v487 = vunpack.c.l.b16 %v416
    %v488 = vunpack.c.l.b16 %v417
    %v489 = vunpack.c.l.b16 %v418
    %v490 = vunpack.c.l.b16 %v419
    %v491 = vunpack.c.l.b16 %v420
    %v492 = vunpack.c.l.b16 %v421
    %v493 = vunpack.c.l.b16 %v422
    %v494 = vunpack.c.l.b16 %v423
    %v495 = vunpack.c.l.b16 %v424
    %v496 = vunpack.c.l.b16 %v425
    %v497 = vunpack.c.l.b16 %v426
    %v498 = vunpack.c.l.b16 %v427
    %v499 = vunpack.c.l.b16 %v428
    %v500 = vunpack.c.l.b16 %v429
    %v501 = vunpack.c.l.b16 %v430
    %v502 = vpack.c.b16 %v471, %v470
    %v503 = vpack.c.b16 %v473, %v472
    %v504 = vpack.c.b16 %v475, %v474
    %v505 = vpack.c.b16 %v477, %v476
    %v506 = vpack.c.b16 %v479, %v478
    %v507 = vpack.c.b16 %v481, %v480
    %v508 = vpack.c.b16 %v483, %v482
    %v509 = vpack.c.b16 %v485, %v484
    %v510 = vpack.c.b16 %v487, %v486
    %v511 = vpack.c.b16 %v489, %v488
    %v512 = vpack.c.b16 %v491, %v490
    %v513 = vpack.c.b16 %v493, %v492
    %v514 = vpack.c.b16 %v495, %v494
    %v515 = vpack.c.b16 %v497, %v496
    %v516 = vpack.c.b16 %v499, %v498
    %v517 = vpack.c.b16 %v501, %v500
    %534 = vmatprep.subr.bf16.mxu0 0
    %535 = vmatpush1.bf16.msra.mxu0 %v502
    %536 = vmatprep.subr.bf16.mxu0 0
    %537 = vmatpush1.bf16.msra.mxu0 %v503
    %538 = vmatprep.subr.bf16.mxu0 0
    %539 = vmatpush1.bf16.msra.mxu0 %v504
    %540 = vmatprep.subr.bf16.mxu0 0
    %541 = vmatpush1.bf16.msra.mxu0 %v505
    %542 = vmatprep.subr.bf16.mxu0 0
    %543 = vmatpush1.bf16.msra.mxu0 %v506
    %544 = vmatprep.subr.bf16.mxu0 0
    %545 = vmatpush1.bf16.msra.mxu0 %v507
    %546 = vmatprep.subr.bf16.mxu0 0
    %547 = vmatpush1.bf16.msra.mxu0 %v508
    %548 = vmatprep.subr.bf16.mxu0 0
    %549 = vmatpush1.bf16.msra.mxu0 %v509
    %550 = vmatprep.subr.bf16.mxu0 0
    %551 = vmatpush1.bf16.msra.mxu0 %v510
    %552 = vmatprep.subr.bf16.mxu0 0
    %553 = vmatpush1.bf16.msra.mxu0 %v511
    %554 = vmatprep.subr.bf16.mxu0 0
    %555 = vmatpush1.bf16.msra.mxu0 %v512
    %556 = vmatprep.subr.bf16.mxu0 0
    %557 = vmatpush1.bf16.msra.mxu0 %v513
    %558 = vmatprep.subr.bf16.mxu0 0
    %559 = vmatpush1.bf16.msra.mxu0 %v514
    %560 = vmatprep.subr.bf16.mxu0 0
    %561 = vmatpush1.bf16.msra.mxu0 %v515
    %562 = vmatprep.subr.bf16.mxu0 0
    %563 = vmatpush1.bf16.msra.mxu0 %v516
    %564 = vmatprep.subr.bf16.mxu0 0
    %565 = vmatpush1.bf16.msra.mxu0 %v517
    %566 = vmatprep.mubr.bf16.mxu0 %v398
    %567 = vmatmul.mubr.bf16.gmra.mrb[0].mxu0 %v397
    %v568 = vpop.f32.mrb[0].mxu0
    %v569 = vadd.f32 %v436, %v568
    %v570 = vpop.f32.mrb[0].mxu0
    %v571 = vpop.f32.mrb[0].mxu0
    %v572 = vpop.f32.mrb[0].mxu0
    %573 = vdwg.mxu0
    %v574 = vtanh.pop %v569
    %575 = vst [vmem:[#allocation10] sm:$0xff] %v574
    // Predicated region
    $region38: #{tpu_custom_call.1} parent=1 // pred_check
      _
    $region39: #{tpu_custom_call.1} parent=1 // pred_check_branch
      %577 = sbr.rel (0) target = $region41
    $region40: #{tpu_custom_call.1} parent=1 // pred_region
      %s579 = ssub.s32 128, 128
      %580 = vsyncadd [#allocation4], %s579
      %s582 = sshll.u32 [#allocation10], 4
      %s583 = int_to_ptr.vmem [resolvable:$true] %s582
      %585 = dma.vmem_to_hbm [thread:$0]  %s583, 128, %s5, [#allocation4]
    $region41: #{tpu_custom_call.1} parent=1 // pred_fallthru
      _
    // Predicated region
    $region42: #{tpu_custom_call.1} parent=1 // pred_check
      _
    $region43: #{tpu_custom_call.1} parent=1 // pred_check_branch
      %587 = sbr.rel (0) target = $region45
    $region44: #{tpu_custom_call.1} parent=1 // pred_region
      %588 = dma.done [#allocation4], 128
    $region45: #{tpu_custom_call.1} parent=1 // pred_fallthru
      _
    %589 = vsyncpa [#allocation3], 1
    %590 = vsyncpa [#allocation6], 1
    %591 = vsyncpa [#allocation9], 1
    %592 = vsyncpa [#allocation4], 1

</llo_original>
